<compile_context>
chip_gen: v7x
topology: tpu7x:2x2x1
jax: 0.10.0
libtpu: 0.0.40
codegen_flags: <defaults>
</compile_context>

<pallas_src>
import functools

import jax
import jax.numpy as jnp
from jax.experimental import pallas as pl
from jax.experimental.pallas import tpu as pltpu


def cnn1d_kernel(x_ref, w1_ref, b1_ref, w2_ref, b2_ref, w3_ref, b3_ref, o_ref,
                 *, L, Lbuf, nb, per_tap):
    f32 = jnp.float32
    R = nb * Lbuf          # rows in this block = nb stacked samples
    C = 128                # lane-dense channel slab width
    CIN = 32               # conv2/conv3 input channels (lane-placement stride)

    # Hoisted per-row "local" time index (position within each stacked sample).
    local = jax.lax.broadcasted_iota(jnp.int32, (R, 1), 0)
    if nb > 1:
        local = local % Lbuf

    # Validity masks depend only on static (lo, hi); build + broadcast each
    # to full (R, C) exactly ONCE in the trace (JAX does not CSE broadcasts).
    mask_cache = {}

    def row_mask(lo, hi):
        key = (lo, hi)
        if key not in mask_cache:
            m = (local < hi) if lo <= 0 else ((local >= lo) & (local < hi))
            mask_cache[key] = jnp.broadcast_to(m, (R, C))
        return mask_cache[key]

    def tshift(h, s, l_valid, force_mask=False):
        # out[t] = h[t+s] if 0 <= local(t)+s < l_valid else 0.
        # The mask kills cross-sample / wrap-around rows of the roll and any
        # garbage rows (>= l_valid) left over from previous layers.
        if s == 0:
            if force_mask:
                return jnp.where(row_mask(0, l_valid), h, 0.0)
            # Unmasked s==0 is safe in the flat conv/pool formulations:
            # garbage rows only feed garbage output rows (>= l_out).
            return h
        rolled = pltpu.roll(h, shift=(-s) % R, axis=0)
        return jnp.where(row_mask(-s, l_valid - s), rolled, 0.0)

    def conv_relu(h, w_ref, b_ref, k, pad, l_in):
        # h has data in lanes [0, 32) and exact zeros elsewhere.
        if per_tap:
            # Per-tap matmuls: w_ref is (k, 128, 128) with tap j's weights in
            # rows [0, 32). Trades (k-1) XLU lane-rolls for (k-1) extra MXU
            # pushes -- a win on v6e/v7x where the XLU is the saturating slot.
            acc = jnp.dot(tshift(h, -pad, l_in), w_ref[0],
                          preferred_element_type=f32)
            for j in range(1, k):
                acc = acc + jnp.dot(tshift(h, j - pad, l_in), w_ref[j],
                                    preferred_element_type=f32)
        else:
            # Fused im2col: tap j is lane-rolled (XLU) into lanes
            # [j*32, (j+1)*32) and added (unused lanes are exactly zero), then
            # ONE (R,128)@(128,128) MXU matmul.
            xcat = tshift(h, -pad, l_in)
            for j in range(1, k):
                xcat = xcat + pltpu.roll(tshift(h, j - pad, l_in),
                                         shift=j * CIN, axis=1)
            acc = jnp.dot(xcat, w_ref[...], preferred_element_type=f32)
        acc = acc + b_ref[...]
        return jnp.maximum(acc, 0.0), l_in + 2 * pad - k + 1

    def maxpool3(h, pad, l_in, k=3):
        # Inputs are post-ReLU (>= 0), so the zero-filled shift is equivalent
        # to PyTorch MaxPool1d's implicit -inf padding here. Do not move or
        # remove the preceding ReLU without revisiting this.
        out = tshift(h, -pad, l_in)
        for j in range(1, k):
            out = jnp.maximum(out, tshift(h, j - pad, l_in))
        return out, l_in + 2 * pad - k + 1

    def maxpool4(h, l_in):
        # k=4, pad=1 hierarchically: p[t] = max(h[t-1], h[t]);
        # out[t] = max(p[t], p[t+2]).  2 sublane rolls instead of 3.
        # The s==0 tap of p MUST be masked: p is re-read at shift +2, so
        # garbage rows (>= l_in) would otherwise leak into the last valid row.
        l_out = l_in - 1
        p = jnp.maximum(tshift(h, -1, l_in),
                        tshift(h, 0, l_in, force_mask=True))
        p2 = jnp.where(row_mask(0, l_out),
                       pltpu.roll(p, shift=(-2) % R, axis=0), 0.0)
        return jnp.maximum(p, p2), l_out

    # conv1: im2col (k=2, Cin=7 -> 14 lanes) is built by the wrapper, so it is
    # a single matmul; output is lane-padded to 128 channels with exact zeros
    # in lanes [32, 128).
    h = jnp.maximum(
        jnp.dot(x_ref[...], w1_ref[...], preferred_element_type=f32)
        + b1_ref[...], 0.0)
    l = L + 1
    h, l = maxpool3(h, pad=1, l_in=l)                       # pool1 k=3
    h, l = conv_relu(h, w2_ref, b2_ref, k=3, pad=1, l_in=l)  # conv2
    h, l = maxpool4(h, l_in=l)                              # pool2 k=4
    h, l = conv_relu(h, w3_ref, b3_ref, k=3, pad=1, l_in=l)  # conv3
    h, l = maxpool3(h, pad=1, l_in=l)                       # pool3 k=3
    assert l == L, (l, L)            # length returns to L for this stack

    # Lane-dense (R, 128) full-vreg store; rows >= L per sample hold garbage
    # and are sliced off by the wrapper together with the zero padding lanes.
    o_ref[...] = h.astype(o_ref.dtype)


def _device_kind():
    try:
        return jax.devices()[0].device_kind.lower()
    except Exception:
        return ""


def _is_two_core(kind):
    # v7x / v5p / v4 have 2 TensorCores per chip; v5e / v6e have 1.
    if any(t in kind for t in ("v7", "tpu7", "v4", "v5p")):
        return True
    return ("v5" in kind) and ("lite" not in kind) and ("v5e" not in kind)


def _use_per_tap_conv(kind):
    # v6e/v7x are XLU/VALU-bound here -> move im2col lane-rolls to the MXU.
    # v5e and unknown parts keep the fused single-matmul path.
    return any(t in kind for t in ("v6", "v7", "tpu7"))


def _vmem_budget(kind):
    cap = None
    try:
        cap = int(pltpu.get_tpu_info().vmem_capacity_bytes)
    except Exception:
        cap = None
    if cap is None:
        cap = (64 << 20) if any(t in kind for t in ("v7", "tpu7")) else (128 << 20)
    vmem_limit = min((cap * 3) // 4, 112 << 20)
    # ~8 KiB of live VMEM per stacked row (f32 activations + cached masks +
    # double-buffered I/O); keep the live set around half the scoped limit.
    rows_cap = max(512, min(8192, (vmem_limit // 2) // (8 << 10)))
    return int(vmem_limit), int(rows_cap)


def cnn1d_forward(x_ncl, params, num_blocks=None):
    """x_ncl: (N, 7, L) float32 in PyTorch NCL layout. Returns (N, 7, L)."""
    N, c_in, L = x_ncl.shape
    # Lbuf >= L + 2 (headroom needed by the hierarchical k=4 pool), 8-aligned.
    Lbuf = ((L + 2 + 7) // 8) * 8
    w1, b1, w2, b2, w3, b3 = params
    c_out = w3.shape[0]
    C = 128                                # lane-dense channel slab width
    k1 = w1.shape[2]                       # = 2

    kind = _device_kind()
    two_core = _is_two_core(kind)
    per_tap = _use_per_tap_conv(kind)
    vmem_limit, rows_cap = _vmem_budget(kind)

    # ---- batching: stack nb samples per block along the sublane/time axis.
    if num_blocks is None:
        num_blocks = 2 if (two_core and N >= 2) else 1
    num_blocks = max(1, min(int(num_blocks), N))
    nb = -(-N // num_blocks)                       # samples per block
    nb = max(1, min(nb, rows_cap // Lbuf))         # generation-aware VMEM cap
    num_blocks = -(-N // nb)
    if two_core and N >= 2 and num_blocks % 2 == 1:
        # Keep both TensorCores busy: round the grid up to an even block count
        # (padding blocks are all-zero and sliced away by the wrapper).
        num_blocks += 1
        nb = max(1, -(-N // num_blocks))
    n_pad = num_blocks * nb
    R = nb * Lbuf

    # ---- weights: output channels zero-padded to 128 lanes so every layer
    # stays lane-dense (lanes [32,128) must remain exactly zero everywhere).
    def flat_w(w):                         # (Cout, Cin, k) -> (k*Cin, Cout)
        cout, cin, k = w.shape
        return jnp.transpose(w, (2, 1, 0)).reshape(k * cin, cout).astype(jnp.float32)

    def im2col_w(w):                       # fused-path slab (128, 128)
        cout, cin, k = w.shape
        return jnp.zeros((C, C), jnp.float32).at[:k * cin, :cout].set(flat_w(w))

    def tapped_w(w):                       # per-tap slabs (k, 128, 128)
        cout, cin, k = w.shape
        slab = jnp.zeros((k, C, C), jnp.float32)
        for j in range(k):
            slab = slab.at[j, :cin, :cout].set(
                jnp.transpose(w[:, :, j]).astype(jnp.float32))
        return slab

    def pad_b(b):
        return jnp.zeros((1, C), jnp.float32).at[0, :b.shape[0]].set(
            b.astype(jnp.float32))

    w1_p = jnp.zeros((k1 * c_in, C), jnp.float32).at[:, :w1.shape[0]].set(flat_w(w1))
    b1_p, b2_p, b3_p = pad_b(b1), pad_b(b2), pad_b(b3)
    if per_tap:
        w2_p, w3_p = tapped_w(w2), tapped_w(w3)
    else:
        w2_p, w3_p = im2col_w(w2), im2col_w(w3)

    # ---- input: conv1 im2col (k=2 taps, padding=1) built on the host; batch
    # padded to n_pad and samples flattened onto the sublane axis.
    x_nlc = jnp.transpose(x_ncl, (0, 2, 1)).astype(jnp.float32)        # (N, L, 7)
    base = jnp.zeros((n_pad, Lbuf, c_in), jnp.float32).at[:N, :L].set(x_nlc)
    taps = []
    for j in range(k1):
        s = j - 1                                                      # pad = 1
        lo, hi = max(0, -s), min(Lbuf, L - s)
        taps.append(jnp.zeros((n_pad, Lbuf, c_in), jnp.float32)
                    .at[:, lo:hi].set(base[:, lo + s:hi + s]))
    x_im2col = jnp.concatenate(taps, axis=-1).reshape(n_pad * Lbuf, k1 * c_in)

    def const_spec(arr):
        nd = arr.ndim
        return pl.BlockSpec(arr.shape, lambda i, _nd=nd: (0,) * _nd)

    kernel = functools.partial(cnn1d_kernel, L=L, Lbuf=Lbuf, nb=nb,
                               per_tap=per_tap)
    out_flat = pl.pallas_call(
        kernel,
        out_shape=jax.ShapeDtypeStruct((num_blocks * R, C), jnp.float32),
        grid_spec=pltpu.PrefetchScalarGridSpec(
            num_scalar_prefetch=0,
            grid=(num_blocks,),
            in_specs=[
                pl.BlockSpec((R, k1 * c_in), lambda i: (i, 0)),
                const_spec(w1_p), const_spec(b1_p),
                const_spec(w2_p), const_spec(b2_p),
                const_spec(w3_p), const_spec(b3_p),
            ],
            out_specs=pl.BlockSpec((R, C), lambda i: (i, 0)),
        ),
        compiler_params=pltpu.CompilerParams(
            dimension_semantics=("parallel",),
            vmem_limit_bytes=vmem_limit),
    )(x_im2col, w1_p, b1_p, w2_p, b2_p, w3_p, b3_p)

    out = out_flat.reshape(n_pad, Lbuf, C)[:N, :L, :c_out]
    return jnp.transpose(out, (0, 2, 1))                               # (N, 7, L)


def ref_forward(x, params):
    """Pure-JAX reference in NCL layout mirroring the PyTorch module."""
    w1, b1, w2, b2, w3, b3 = params

    def conv(x, w, b, pad):
        c_out, _, k = w.shape
        L = x.shape[2]
        xp = jnp.pad(x, ((0, 0), (0, 0), (pad, pad)))
        Lout = L + 2 * pad - k + 1
        out = jnp.zeros((x.shape[0], c_out, Lout), jnp.float32)
        for j in range(k):
            out = out + jnp.einsum('ncl,oc->nol', xp[:, :, j:j + Lout], w[:, :, j])
        return out + b[None, :, None]

    def pool(x, k, pad):
        L = x.shape[2]
        xp = jnp.pad(x, ((0, 0), (0, 0), (pad, pad)), constant_values=-jnp.inf)
        Lout = L + 2 * pad - k + 1
        out = xp[:, :, 0:Lout]
        for j in range(1, k):
            out = jnp.maximum(out, xp[:, :, j:j + Lout])
        return out

    h = jax.nn.relu(conv(x, w1, b1, 1))
    h = pool(h, 3, 1)
    h = jax.nn.relu(conv(h, w2, b2, 1))
    h = pool(h, 4, 1)
    h = jax.nn.relu(conv(h, w3, b3, 1))
    h = pool(h, 3, 1)
    return h


if __name__ == "__main__":
    key = jax.random.PRNGKey(0)
    ks = jax.random.split(key, 7)
    N, L = 2, 16
    x = jax.random.normal(ks[0], (N, 7, L), jnp.float32)

    def init(k, shape, fan_in):
        bound = 1.0 / (fan_in ** 0.5)
        return jax.random.uniform(k, shape, jnp.float32, -bound, bound)

    w1 = init(ks[1], (32, 7, 2), 7 * 2)
    b1 = init(ks[2], (32,), 7 * 2)
    w2 = init(ks[3], (32, 32, 3), 32 * 3)
    b2 = init(ks[4], (32,), 32 * 3)
    w3 = init(ks[5], (7, 32, 3), 32 * 3)
    b3 = init(ks[6], (7,), 32 * 3)
    params = (w1, b1, w2, b2, w3, b3)

    out = cnn1d_forward(x, params)
    jax.block_until_ready(out)

    ref = ref_forward(x, params)
    assert out.shape == (N, 7, L), out.shape
    assert jnp.allclose(out, ref, atol=1e-4, rtol=1e-4), \
        float(jnp.max(jnp.abs(out - ref)))
    print("KERNEL_OK")
</pallas_src>

<mosaic_0001>
module attributes {stable_mosaic.version = 11 : i64} {
  func.func @cnn1d_kernel(%arg0: i32, %arg1: memref<48x14xf32, #tpu.memory_space<vmem>>, %arg2: memref<14x128xf32, #tpu.memory_space<vmem>>, %arg3: memref<1x128xf32, #tpu.memory_space<vmem>>, %arg4: memref<128x128xf32, #tpu.memory_space<vmem>>, %arg5: memref<1x128xf32, #tpu.memory_space<vmem>>, %arg6: memref<128x128xf32, #tpu.memory_space<vmem>>, %arg7: memref<1x128xf32, #tpu.memory_space<vmem>>, %arg8: memref<48x128xf32, #tpu.memory_space<vmem>>) attributes {dimension_semantics = [#tpu.dimension_semantics<parallel>], iteration_bounds = array<i64: 1>, scalar_prefetch = 0 : i64, scratch_operands = 0 : i64, tpu.core_type = #tpu.core_type<tc>, window_params = [{transform_indices = @transform_0, window_bounds = array<i64: 48, 14>}, {pipeline_mode = #tpu.pipeline_mode<synchronous>, transform_indices = @transform_1, window_bounds = array<i64: 14, 128>}, {pipeline_mode = #tpu.pipeline_mode<synchronous>, transform_indices = @transform_2, window_bounds = array<i64: 1, 128>}, {pipeline_mode = #tpu.pipeline_mode<synchronous>, transform_indices = @transform_3, window_bounds = array<i64: 128, 128>}, {pipeline_mode = #tpu.pipeline_mode<synchronous>, transform_indices = @transform_4, window_bounds = array<i64: 1, 128>}, {pipeline_mode = #tpu.pipeline_mode<synchronous>, transform_indices = @transform_5, window_bounds = array<i64: 128, 128>}, {pipeline_mode = #tpu.pipeline_mode<synchronous>, transform_indices = @transform_6, window_bounds = array<i64: 1, 128>}, {transform_indices = @transform_7, window_bounds = array<i64: 48, 128>}]} {
    %0 = tpu.iota {dimensions = array<i32: 0>} : vector<48x1xi32>
    %c24_i32 = arith.constant 24 : i32
    %c0_i32 = arith.constant 0 : i32
    %1 = arith.cmpi eq, %c24_i32, %c0_i32 : i32
    %c1_i32 = arith.constant 1 : i32
    %2 = arith.select %1, %c1_i32, %c24_i32 : i32
    %3 = vector.broadcast %2 : i32 to vector<48x1xi32>
    %4 = arith.remsi %0, %3 : vector<48x1xi32>
    %c0_i32_0 = arith.constant 0 : i32
    %5 = vector.broadcast %c0_i32_0 : i32 to vector<48x1xi32>
    %6 = arith.cmpi ne, %4, %5 : vector<48x1xi32>
    %c0_i32_1 = arith.constant 0 : i32
    %7 = vector.broadcast %c0_i32_1 : i32 to vector<48x1xi32>
    %8 = arith.cmpi slt, %4, %7 : vector<48x1xi32>
    %c0_i32_2 = arith.constant 0 : i32
    %9 = arith.cmpi slt, %2, %c0_i32_2 : i32
    %10 = vector.broadcast %9 : i1 to vector<48x1xi1>
    %11 = vector.broadcast %10 : vector<48x1xi1> to vector<48x1xi1>
    %12 = arith.xori %8, %11 : vector<48x1xi1>
    %13 = arith.andi %12, %6 : vector<48x1xi1>
    %14 = vector.broadcast %2 : i32 to vector<48x1xi32>
    %15 = arith.addi %4, %14 : vector<48x1xi32>
    %16 = arith.select %13, %15, %4 : vector<48x1xi1>, vector<48x1xi32>
    %c0 = arith.constant 0 : index
    %c0_3 = arith.constant 0 : index
    %17 = vector.load %arg1[%c0, %c0_3] : memref<48x14xf32, #tpu.memory_space<vmem>>, vector<48x14xf32>
    %c0_4 = arith.constant 0 : index
    %c0_5 = arith.constant 0 : index
    %18 = vector.load %arg2[%c0_4, %c0_5] : memref<14x128xf32, #tpu.memory_space<vmem>>, vector<14x128xf32>
    %cst = arith.constant dense<0.000000e+00> : vector<48x128xf32>
    %19 = tpu.matmul %17, %18, %cst {dimension_numbers = #tpu.dot_dimension_numbers<[1], [0], [0], [1], [0, 0, 1, 1], [], []>} : vector<48x14xf32>, vector<14x128xf32>, vector<48x128xf32> -> vector<48x128xf32>
    %c0_6 = arith.constant 0 : index
    %c0_7 = arith.constant 0 : index
    %20 = vector.load %arg3[%c0_6, %c0_7] : memref<1x128xf32, #tpu.memory_space<vmem>>, vector<1x128xf32>
    %21 = vector.broadcast %20 : vector<1x128xf32> to vector<48x128xf32>
    %22 = arith.addf %19, %21 : vector<48x128xf32>
    %cst_8 = arith.constant 0.000000e+00 : f32
    %23 = vector.broadcast %cst_8 : f32 to vector<48x128xf32>
    %24 = arith.maximumf %22, %23 : vector<48x128xf32>
    %c1_i32_9 = arith.constant 1 : i32
    %25 = tpu.dynamic_rotate %24 by %c1_i32_9 dim 0 : vector<48x128xf32>, i32 -> vector<48x128xf32>
    %c1_i32_10 = arith.constant 1 : i32
    %26 = vector.broadcast %c1_i32_10 : i32 to vector<48x1xi32>
    %27 = arith.cmpi sge, %16, %26 : vector<48x1xi32>
    %c18_i32 = arith.constant 18 : i32
    %28 = vector.broadcast %c18_i32 : i32 to vector<48x1xi32>
    %29 = arith.cmpi slt, %16, %28 : vector<48x1xi32>
    %30 = arith.andi %27, %29 : vector<48x1xi1>
    %31 = vector.shape_cast %30 : vector<48x1xi1> to vector<48x1xi1>
    %32 = vector.broadcast %31 : vector<48x1xi1> to vector<48x128xi1>
    %cst_11 = arith.constant 0.000000e+00 : f32
    %33 = vector.broadcast %cst_11 : f32 to vector<48x128xf32>
    %34 = arith.select %32, %25, %33 : vector<48x128xi1>, vector<48x128xf32>
    %35 = arith.maximumf %34, %24 : vector<48x128xf32>
    %c47_i32 = arith.constant 47 : i32
    %36 = tpu.dynamic_rotate %24 by %c47_i32 dim 0 : vector<48x128xf32>, i32 -> vector<48x128xf32>
    %c16_i32 = arith.constant 16 : i32
    %37 = vector.broadcast %c16_i32 : i32 to vector<48x1xi32>
    %38 = arith.cmpi slt, %16, %37 : vector<48x1xi32>
    %39 = vector.shape_cast %38 : vector<48x1xi1> to vector<48x1xi1>
    %40 = vector.broadcast %39 : vector<48x1xi1> to vector<48x128xi1>
    %cst_12 = arith.constant 0.000000e+00 : f32
    %41 = vector.broadcast %cst_12 : f32 to vector<48x128xf32>
    %42 = arith.select %40, %36, %41 : vector<48x128xi1>, vector<48x128xf32>
    %43 = arith.maximumf %35, %42 : vector<48x128xf32>
    %c1_i32_13 = arith.constant 1 : i32
    %44 = tpu.dynamic_rotate %43 by %c1_i32_13 dim 0 : vector<48x128xf32>, i32 -> vector<48x128xf32>
    %cst_14 = arith.constant 0.000000e+00 : f32
    %45 = vector.broadcast %cst_14 : f32 to vector<48x128xf32>
    %46 = arith.select %32, %44, %45 : vector<48x128xi1>, vector<48x128xf32>
    %c32_i32 = arith.constant 32 : i32
    %47 = tpu.dynamic_rotate %43 by %c32_i32 dim 1 : vector<48x128xf32>, i32 -> vector<48x128xf32>
    %48 = arith.addf %46, %47 : vector<48x128xf32>
    %c47_i32_15 = arith.constant 47 : i32
    %49 = tpu.dynamic_rotate %43 by %c47_i32_15 dim 0 : vector<48x128xf32>, i32 -> vector<48x128xf32>
    %cst_16 = arith.constant 0.000000e+00 : f32
    %50 = vector.broadcast %cst_16 : f32 to vector<48x128xf32>
    %51 = arith.select %40, %49, %50 : vector<48x128xi1>, vector<48x128xf32>
    %c64_i32 = arith.constant 64 : i32
    %52 = tpu.dynamic_rotate %51 by %c64_i32 dim 1 : vector<48x128xf32>, i32 -> vector<48x128xf32>
    %53 = arith.addf %48, %52 : vector<48x128xf32>
    %c0_17 = arith.constant 0 : index
    %c0_18 = arith.constant 0 : index
    %54 = vector.load %arg4[%c0_17, %c0_18] : memref<128x128xf32, #tpu.memory_space<vmem>>, vector<128x128xf32>
    %cst_19 = arith.constant dense<0.000000e+00> : vector<48x128xf32>
    %55 = tpu.matmul %53, %54, %cst_19 {dimension_numbers = #tpu.dot_dimension_numbers<[1], [0], [0], [1], [0, 0, 1, 1], [], []>} : vector<48x128xf32>, vector<128x128xf32>, vector<48x128xf32> -> vector<48x128xf32>
    %c0_20 = arith.constant 0 : index
    %c0_21 = arith.constant 0 : index
    %56 = vector.load %arg5[%c0_20, %c0_21] : memref<1x128xf32, #tpu.memory_space<vmem>>, vector<1x128xf32>
    %57 = vector.broadcast %56 : vector<1x128xf32> to vector<48x128xf32>
    %58 = arith.addf %55, %57 : vector<48x128xf32>
    %cst_22 = arith.constant 0.000000e+00 : f32
    %59 = vector.broadcast %cst_22 : f32 to vector<48x128xf32>
    %60 = arith.maximumf %58, %59 : vector<48x128xf32>
    %c1_i32_23 = arith.constant 1 : i32
    %61 = tpu.dynamic_rotate %60 by %c1_i32_23 dim 0 : vector<48x128xf32>, i32 -> vector<48x128xf32>
    %cst_24 = arith.constant 0.000000e+00 : f32
    %62 = vector.broadcast %cst_24 : f32 to vector<48x128xf32>
    %63 = arith.select %32, %61, %62 : vector<48x128xi1>, vector<48x128xf32>
    %c17_i32 = arith.constant 17 : i32
    %64 = vector.broadcast %c17_i32 : i32 to vector<48x1xi32>
    %65 = arith.cmpi slt, %16, %64 : vector<48x1xi32>
    %66 = vector.shape_cast %65 : vector<48x1xi1> to vector<48x1xi1>
    %67 = vector.broadcast %66 : vector<48x1xi1> to vector<48x128xi1>
    %cst_25 = arith.constant 0.000000e+00 : f32
    %68 = vector.broadcast %cst_25 : f32 to vector<48x128xf32>
    %69 = arith.select %67, %60, %68 : vector<48x128xi1>, vector<48x128xf32>
    %70 = arith.maximumf %63, %69 : vector<48x128xf32>
    %c16_i32_26 = arith.constant 16 : i32
    %71 = vector.broadcast %c16_i32_26 : i32 to vector<48x1xi32>
    %72 = arith.cmpi slt, %16, %71 : vector<48x1xi32>
    %73 = vector.shape_cast %72 : vector<48x1xi1> to vector<48x1xi1>
    %74 = vector.broadcast %73 : vector<48x1xi1> to vector<48x128xi1>
    %c46_i32 = arith.constant 46 : i32
    %75 = tpu.dynamic_rotate %70 by %c46_i32 dim 0 : vector<48x128xf32>, i32 -> vector<48x128xf32>
    %cst_27 = arith.constant 0.000000e+00 : f32
    %76 = vector.broadcast %cst_27 : f32 to vector<48x128xf32>
    %77 = arith.select %74, %75, %76 : vector<48x128xi1>, vector<48x128xf32>
    %78 = arith.maximumf %70, %77 : vector<48x128xf32>
    %c1_i32_28 = arith.constant 1 : i32
    %79 = tpu.dynamic_rotate %78 by %c1_i32_28 dim 0 : vector<48x128xf32>, i32 -> vector<48x128xf32>
    %c1_i32_29 = arith.constant 1 : i32
    %80 = vector.broadcast %c1_i32_29 : i32 to vector<48x1xi32>
    %81 = arith.cmpi sge, %16, %80 : vector<48x1xi32>
    %c17_i32_30 = arith.constant 17 : i32
    %82 = vector.broadcast %c17_i32_30 : i32 to vector<48x1xi32>
    %83 = arith.cmpi slt, %16, %82 : vector<48x1xi32>
    %84 = arith.andi %81, %83 : vector<48x1xi1>
    %85 = vector.shape_cast %84 : vector<48x1xi1> to vector<48x1xi1>
    %86 = vector.broadcast %85 : vector<48x1xi1> to vector<48x128xi1>
    %cst_31 = arith.constant 0.000000e+00 : f32
    %87 = vector.broadcast %cst_31 : f32 to vector<48x128xf32>
    %88 = arith.select %86, %79, %87 : vector<48x128xi1>, vector<48x128xf32>
    %c32_i32_32 = arith.constant 32 : i32
    %89 = tpu.dynamic_rotate %78 by %c32_i32_32 dim 1 : vector<48x128xf32>, i32 -> vector<48x128xf32>
    %90 = arith.addf %88, %89 : vector<48x128xf32>
    %c47_i32_33 = arith.constant 47 : i32
    %91 = tpu.dynamic_rotate %78 by %c47_i32_33 dim 0 : vector<48x128xf32>, i32 -> vector<48x128xf32>
    %c15_i32 = arith.constant 15 : i32
    %92 = vector.broadcast %c15_i32 : i32 to vector<48x1xi32>
    %93 = arith.cmpi slt, %16, %92 : vector<48x1xi32>
    %94 = vector.shape_cast %93 : vector<48x1xi1> to vector<48x1xi1>
    %95 = vector.broadcast %94 : vector<48x1xi1> to vector<48x128xi1>
    %cst_34 = arith.constant 0.000000e+00 : f32
    %96 = vector.broadcast %cst_34 : f32 to vector<48x128xf32>
    %97 = arith.select %95, %91, %96 : vector<48x128xi1>, vector<48x128xf32>
    %c64_i32_35 = arith.constant 64 : i32
    %98 = tpu.dynamic_rotate %97 by %c64_i32_35 dim 1 : vector<48x128xf32>, i32 -> vector<48x128xf32>
    %99 = arith.addf %90, %98 : vector<48x128xf32>
    %c0_36 = arith.constant 0 : index
    %c0_37 = arith.constant 0 : index
    %100 = vector.load %arg6[%c0_36, %c0_37] : memref<128x128xf32, #tpu.memory_space<vmem>>, vector<128x128xf32>
    %cst_38 = arith.constant dense<0.000000e+00> : vector<48x128xf32>
    %101 = tpu.matmul %99, %100, %cst_38 {dimension_numbers = #tpu.dot_dimension_numbers<[1], [0], [0], [1], [0, 0, 1, 1], [], []>} : vector<48x128xf32>, vector<128x128xf32>, vector<48x128xf32> -> vector<48x128xf32>
    %c0_39 = arith.constant 0 : index
    %c0_40 = arith.constant 0 : index
    %102 = vector.load %arg7[%c0_39, %c0_40] : memref<1x128xf32, #tpu.memory_space<vmem>>, vector<1x128xf32>
    %103 = vector.broadcast %102 : vector<1x128xf32> to vector<48x128xf32>
    %104 = arith.addf %101, %103 : vector<48x128xf32>
    %cst_41 = arith.constant 0.000000e+00 : f32
    %105 = vector.broadcast %cst_41 : f32 to vector<48x128xf32>
    %106 = arith.maximumf %104, %105 : vector<48x128xf32>
    %c1_i32_42 = arith.constant 1 : i32
    %107 = tpu.dynamic_rotate %106 by %c1_i32_42 dim 0 : vector<48x128xf32>, i32 -> vector<48x128xf32>
    %cst_43 = arith.constant 0.000000e+00 : f32
    %108 = vector.broadcast %cst_43 : f32 to vector<48x128xf32>
    %109 = arith.select %86, %107, %108 : vector<48x128xi1>, vector<48x128xf32>
    %110 = arith.maximumf %109, %106 : vector<48x128xf32>
    %c47_i32_44 = arith.constant 47 : i32
    %111 = tpu.dynamic_rotate %106 by %c47_i32_44 dim 0 : vector<48x128xf32>, i32 -> vector<48x128xf32>
    %cst_45 = arith.constant 0.000000e+00 : f32
    %112 = vector.broadcast %cst_45 : f32 to vector<48x128xf32>
    %113 = arith.select %95, %111, %112 : vector<48x128xi1>, vector<48x128xf32>
    %114 = arith.maximumf %110, %113 : vector<48x128xf32>
    %c0_46 = arith.constant 0 : index
    %c0_47 = arith.constant 0 : index
    %115 = vector.load %arg8[%c0_46, %c0_47] : memref<48x128xf32, #tpu.memory_space<vmem>>, vector<48x128xf32>
    tpu.vector_store %arg8[%c0_46, %c0_47], %114 {strides = array<i32>} : memref<48x128xf32, #tpu.memory_space<vmem>>, vector<48x128xf32>,
    return
  }
  func.func @transform_0(%arg0: i32) -> (i32, i32) {
    %c0_i32 = arith.constant 0 : i32
    %c0_i32_0 = arith.constant 0 : i32
    return %arg0, %c0_i32 : i32, i32
  }
  func.func @transform_1(%arg0: i32) -> (i32, i32) {
    %c0_i32 = arith.constant 0 : i32
    %c0_i32_0 = arith.constant 0 : i32
    %c0_i32_1 = arith.constant 0 : i32
    return %c0_i32, %c0_i32_0 : i32, i32
  }
  func.func @transform_2(%arg0: i32) -> (i32, i32) {
    %c0_i32 = arith.constant 0 : i32
    %c0_i32_0 = arith.constant 0 : i32
    %c0_i32_1 = arith.constant 0 : i32
    return %c0_i32, %c0_i32_0 : i32, i32
  }
  func.func @transform_3(%arg0: i32) -> (i32, i32) {
    %c0_i32 = arith.constant 0 : i32
    %c0_i32_0 = arith.constant 0 : i32
    %c0_i32_1 = arith.constant 0 : i32
    return %c0_i32, %c0_i32_0 : i32, i32
  }
  func.func @transform_4(%arg0: i32) -> (i32, i32) {
    %c0_i32 = arith.constant 0 : i32
    %c0_i32_0 = arith.constant 0 : i32
    %c0_i32_1 = arith.constant 0 : i32
    return %c0_i32, %c0_i32_0 : i32, i32
  }
  func.func @transform_5(%arg0: i32) -> (i32, i32) {
    %c0_i32 = arith.constant 0 : i32
    %c0_i32_0 = arith.constant 0 : i32
    %c0_i32_1 = arith.constant 0 : i32
    return %c0_i32, %c0_i32_0 : i32, i32
  }
  func.func @transform_6(%arg0: i32) -> (i32, i32) {
    %c0_i32 = arith.constant 0 : i32
    %c0_i32_0 = arith.constant 0 : i32
    %c0_i32_1 = arith.constant 0 : i32
    return %c0_i32, %c0_i32_0 : i32, i32
  }
  func.func @transform_7(%arg0: i32) -> (i32, i32) {
    %c0_i32 = arith.constant 0 : i32
    %c0_i32_0 = arith.constant 0 : i32
    return %arg0, %c0_i32 : i32, i32
  }
}

</mosaic_0001>

<llo_original>
// kernel: tpu_custom_call.1
$region0: #{tpu_custom_call.1}
  #allocation0 [shape = 'u32[]', space=smem, size = 0x4, offset = 0x4, fixed_abs, tag = 'smem constant byte address 0x4 - core index']
  #allocation1 [shape = 'u32[144,128]{1,0:T(1,128)}', space=vmem, size = 0x12000, scoped, tag = 'internal scratch']
  %s0 = inlined_call_operand.hbm [shape: f32[48,14], index: 0, kind: input, shape index: {}]
  %s1 = inlined_call_operand.hbm [shape: f32[14,128], index: 1, kind: input, shape index: {}]
  %s2 = inlined_call_operand.hbm [shape: f32[1,128], index: 2, kind: input, shape index: {}]
  %s3 = inlined_call_operand.hbm [shape: f32[128,128], index: 3, kind: input, shape index: {}]
  %s4 = inlined_call_operand.hbm [shape: f32[1,128], index: 4, kind: input, shape index: {}]
  %s5 = inlined_call_operand.hbm [shape: f32[128,128], index: 5, kind: input, shape index: {}]
  %s6 = inlined_call_operand.hbm [shape: f32[1,128], index: 6, kind: input, shape index: {}]
  %s7 = inlined_call_operand.hbm [shape: f32[48,128], index: 7, kind: output, shape index: {}]
  %s8 = sld [smem:[#allocation0]]
  $region66: #{tpu_custom_call.1} parent=0
    _
  %s10 = ssub.s32 1, %s8
  %s11 = scalar_select 0, %s10, %s8
  $region1: #{tpu_custom_call.1} parent=0
    #allocation2 [shape = 'u8[24576]{0}', space=vmem, size = 0x6000, scoped, tag = 'input window, operand 0, single buffered']
    #allocation3 [shape = 's32[1]{0}', space=sflag, size = 0x4, scoped, tag = 'scoped memory for tpu_custom_call.1']
    #allocation4 [shape = 's32[1]{0}', space=sflag, size = 0x4, scoped, tag = 'scoped memory for tpu_custom_call.1']
    #allocation5 [shape = 'u8[8192]{0}', space=vmem, size = 0x2000, scoped, tag = 'input window, operand 1, single buffered']
    #allocation6 [shape = 's32[1]{0}', space=sflag, size = 0x4, scoped, tag = 'scoped memory for tpu_custom_call.1']
    #allocation7 [shape = 'u8[512]{0}', space=vmem, size = 0x400, scoped, tag = 'input window, operand 2, single buffered']
    #allocation8 [shape = 'u8[65536]{0}', space=vmem, size = 0x10000, scoped, tag = 'input window, operand 3, single buffered']
    #allocation9 [shape = 's32[1]{0}', space=sflag, size = 0x4, scoped, tag = 'scoped memory for tpu_custom_call.1']
    #allocation10 [shape = 'u8[512]{0}', space=vmem, size = 0x400, scoped, tag = 'input window, operand 4, single buffered']
    #allocation11 [shape = 'u8[65536]{0}', space=vmem, size = 0x10000, scoped, tag = 'input window, operand 5, single buffered']
    #allocation12 [shape = 's32[1]{0}', space=sflag, size = 0x4, scoped, tag = 'scoped memory for tpu_custom_call.1']
    #allocation13 [shape = 'u8[512]{0}', space=vmem, size = 0x400, scoped, tag = 'input window, operand 6, single buffered']
    #allocation14 [shape = 'u8[24576]{0}', space=vmem, size = 0x6000, scoped, tag = 'output window, operand 0, single buffered']
    %12 = vsyncpa [#allocation3], 0
    %13 = vsyncpa [#allocation6], 0
    %14 = vsyncpa [#allocation9], 0
    %15 = vsyncpa [#allocation12], 0
    %16 = vsyncpa [#allocation4], 0
    // Predicated region
    $region2: #{tpu_custom_call.1} parent=1 // pred_check
      _
    $region3: #{tpu_custom_call.1} parent=1 // pred_check_branch
      %18 = sbr.rel (0) target = $region5
    $region4: #{tpu_custom_call.1} parent=1 // pred_region
      %s20 = ssub.s32 768, 768
      %21 = vsyncadd [#allocation3], %s20
      %s22 = sshll.u32 [#allocation2], 4
      %s23 = int_to_ptr.vmem [resolvable:$true] %s22
      %28 = dma.hbm_to_vmem [thread:$0]  %s0, 768, %s23, [#allocation3], 128, 128, 8
    $region5: #{tpu_custom_call.1} parent=1 // pred_fallthru
      _
    // Predicated region
    $region6: #{tpu_custom_call.1} parent=1 // pred_check
      _
    $region7: #{tpu_custom_call.1} parent=1 // pred_check_branch
      %30 = sbr.rel (0) target = $region9
    $region8: #{tpu_custom_call.1} parent=1 // pred_region
      %s32 = ssub.s32 256, 256
      %33 = vsyncadd [#allocation6], %s32
      %s34 = sshll.u32 [#allocation5], 4
      %s35 = int_to_ptr.vmem [resolvable:$true] %s34
      %40 = dma.hbm_to_vmem [thread:$0]  %s1, 256, %s35, [#allocation6], 128, 128, 8
    $region9: #{tpu_custom_call.1} parent=1 // pred_fallthru
      _
    // Predicated region
    $region10: #{tpu_custom_call.1} parent=1 // pred_check
      _
    $region11: #{tpu_custom_call.1} parent=1 // pred_check_branch
      %42 = sbr.rel (0) target = $region13
    $region12: #{tpu_custom_call.1} parent=1 // pred_region
      %s44 = ssub.s32 16, 16
      %45 = vsyncadd [#allocation6], %s44
      %s47 = sshll.u32 [#allocation7], 4
      %s48 = int_to_ptr.vmem [resolvable:$true] %s47
      %50 = dma.hbm_to_vmem [thread:$0]  %s2, 16, %s48, [#allocation6]
    $region13: #{tpu_custom_call.1} parent=1 // pred_fallthru
      _
    // Predicated region
    $region14: #{tpu_custom_call.1} parent=1 // pred_check
      _
    $region15: #{tpu_custom_call.1} parent=1 // pred_check_branch
      %52 = sbr.rel (0) target = $region17
    $region16: #{tpu_custom_call.1} parent=1 // pred_region
      %s54 = ssub.s32 2048, 2048
      %55 = vsyncadd [#allocation9], %s54
      %s56 = sshll.u32 [#allocation8], 4
      %s57 = int_to_ptr.vmem [resolvable:$true] %s56
      %62 = dma.hbm_to_vmem [thread:$0]  %s3, 2048, %s57, [#allocation9], 128, 128, 8
    $region17: #{tpu_custom_call.1} parent=1 // pred_fallthru
      _
    // Predicated region
    $region18: #{tpu_custom_call.1} parent=1 // pred_check
      _
    $region19: #{tpu_custom_call.1} parent=1 // pred_check_branch
      %64 = sbr.rel (0) target = $region21
    $region20: #{tpu_custom_call.1} parent=1 // pred_region
      %s66 = ssub.s32 16, 16
      %67 = vsyncadd [#allocation9], %s66
      %s69 = sshll.u32 [#allocation10], 4
      %s70 = int_to_ptr.vmem [resolvable:$true] %s69
      %72 = dma.hbm_to_vmem [thread:$0]  %s4, 16, %s70, [#allocation9]
    $region21: #{tpu_custom_call.1} parent=1 // pred_fallthru
      _
    // Predicated region
    $region22: #{tpu_custom_call.1} parent=1 // pred_check
      _
    $region23: #{tpu_custom_call.1} parent=1 // pred_check_branch
      %74 = sbr.rel (0) target = $region25
    $region24: #{tpu_custom_call.1} parent=1 // pred_region
      %s76 = ssub.s32 2048, 2048
      %77 = vsyncadd [#allocation12], %s76
      %s78 = sshll.u32 [#allocation11], 4
      %s79 = int_to_ptr.vmem [resolvable:$true] %s78
      %84 = dma.hbm_to_vmem [thread:$0]  %s5, 2048, %s79, [#allocation12], 128, 128, 8
    $region25: #{tpu_custom_call.1} parent=1 // pred_fallthru
      _
    // Predicated region
    $region26: #{tpu_custom_call.1} parent=1 // pred_check
      _
    $region27: #{tpu_custom_call.1} parent=1 // pred_check_branch
      %86 = sbr.rel (0) target = $region29
    $region28: #{tpu_custom_call.1} parent=1 // pred_region
      %s88 = ssub.s32 16, 16
      %89 = vsyncadd [#allocation12], %s88
      %s91 = sshll.u32 [#allocation13], 4
      %s92 = int_to_ptr.vmem [resolvable:$true] %s91
      %94 = dma.hbm_to_vmem [thread:$0]  %s6, 16, %s92, [#allocation12]
    $region29: #{tpu_custom_call.1} parent=1 // pred_fallthru
      _
    // Predicated region
    $region30: #{tpu_custom_call.1} parent=1 // pred_check
      _
    $region31: #{tpu_custom_call.1} parent=1 // pred_check_branch
      %96 = sbr.rel (0) target = $region33
    $region32: #{tpu_custom_call.1} parent=1 // pred_region
      %97 = dma.done [#allocation3], 768
    $region33: #{tpu_custom_call.1} parent=1 // pred_fallthru
      _
    // Predicated region
    $region34: #{tpu_custom_call.1} parent=1 // pred_check
      _
    $region35: #{tpu_custom_call.1} parent=1 // pred_check_branch
      %99 = sbr.rel (0) target = $region37
    $region36: #{tpu_custom_call.1} parent=1 // pred_region
      %100 = dma.done [#allocation6], 256
    $region37: #{tpu_custom_call.1} parent=1 // pred_fallthru
      _
    // Predicated region
    $region38: #{tpu_custom_call.1} parent=1 // pred_check
      _
    $region39: #{tpu_custom_call.1} parent=1 // pred_check_branch
      %102 = sbr.rel (0) target = $region41
    $region40: #{tpu_custom_call.1} parent=1 // pred_region
      %103 = dma.done [#allocation6], 16
    $region41: #{tpu_custom_call.1} parent=1 // pred_fallthru
      _
    // Predicated region
    $region42: #{tpu_custom_call.1} parent=1 // pred_check
      _
    $region43: #{tpu_custom_call.1} parent=1 // pred_check_branch
      %105 = sbr.rel (0) target = $region45
    $region44: #{tpu_custom_call.1} parent=1 // pred_region
      %106 = dma.done [#allocation9], 2048
    $region45: #{tpu_custom_call.1} parent=1 // pred_fallthru
      _
    // Predicated region
    $region46: #{tpu_custom_call.1} parent=1 // pred_check
      _
    $region47: #{tpu_custom_call.1} parent=1 // pred_check_branch
      %108 = sbr.rel (0) target = $region49
    $region48: #{tpu_custom_call.1} parent=1 // pred_region
      %109 = dma.done [#allocation9], 16
    $region49: #{tpu_custom_call.1} parent=1 // pred_fallthru
      _
    // Predicated region
    $region50: #{tpu_custom_call.1} parent=1 // pred_check
      _
    $region51: #{tpu_custom_call.1} parent=1 // pred_check_branch
      %111 = sbr.rel (0) target = $region53
    $region52: #{tpu_custom_call.1} parent=1 // pred_region
      %112 = dma.done [#allocation12], 2048
    $region53: #{tpu_custom_call.1} parent=1 // pred_fallthru
      _
    // Predicated region
    $region54: #{tpu_custom_call.1} parent=1 // pred_check
      _
    $region55: #{tpu_custom_call.1} parent=1 // pred_check_branch
      %114 = sbr.rel (0) target = $region57
    $region56: #{tpu_custom_call.1} parent=1 // pred_region
      %115 = dma.done [#allocation12], 16
    $region57: #{tpu_custom_call.1} parent=1 // pred_fallthru
      _
    %v116 = vlaneseq
    %v117 = vshrl.u32 %v116, 7
    %v118 = vadd.s32 %v117, 8
    %v119 = vadd.s32 %v117, 16
    %v120 = vadd.s32 %v117, 24
    %v121 = vadd.s32 %v117, 32
    %v122 = vadd.s32 %v117, 40
    %vm123 = vcmp.lt.s32.totalorder %v117, 0
    %v124 = vsub.s32 0, %v117
    %v125 = vsel %vm123, %v124, %v117
    %v126 = vmul.u32.u64.compose %v125, 2863311531
    %v127 = vextract.low.u32 %v126
    %v128 = vextract.high.u32 %v126
    %v129 = vshrl.u32 %v128, 4
    %v130 = vmul.u32 %v129, 24
    %v131 = vsub.s32 %v125, %v130
    %v132 = vsub.s32 0, %v131
    %v133 = vsel %vm123, %v132, %v131
    %vm134 = vcmp.lt.s32.totalorder %v118, 0
    %v135 = vsub.s32 0, %v118
    %v136 = vsel %vm134, %v135, %v118
    %v137 = vmul.u32.u64.compose %v136, 2863311531
    %v138 = vextract.low.u32 %v137
    %v139 = vextract.high.u32 %v137
    %v140 = vshrl.u32 %v139, 4
    %v141 = vmul.u32 %v140, 24
    %v142 = vsub.s32 %v136, %v141
    %v143 = vsub.s32 0, %v142
    %v144 = vsel %vm134, %v143, %v142
    %vm145 = vcmp.lt.s32.totalorder %v119, 0
    %v146 = vsub.s32 0, %v119
    %v147 = vsel %vm145, %v146, %v119
    %v148 = vmul.u32.u64.compose %v147, 2863311531
    %v149 = vextract.low.u32 %v148
    %v150 = vextract.high.u32 %v148
    %v151 = vshrl.u32 %v150, 4
    %v152 = vmul.u32 %v151, 24
    %v153 = vsub.s32 %v147, %v152
    %v154 = vsub.s32 0, %v153
    %v155 = vsel %vm145, %v154, %v153
    %vm156 = vcmp.lt.s32.totalorder %v120, 0
    %v157 = vsub.s32 0, %v120
    %v158 = vsel %vm156, %v157, %v120
    %v159 = vmul.u32.u64.compose %v158, 2863311531
    %v160 = vextract.low.u32 %v159
    %v161 = vextract.high.u32 %v159
    %v162 = vshrl.u32 %v161, 4
    %v163 = vmul.u32 %v162, 24
    %v164 = vsub.s32 %v158, %v163
    %v165 = vsub.s32 0, %v164
    %v166 = vsel %vm156, %v165, %v164
    %vm167 = vcmp.lt.s32.totalorder %v121, 0
    %v168 = vsub.s32 0, %v121
    %v169 = vsel %vm167, %v168, %v121
    %v170 = vmul.u32.u64.compose %v169, 2863311531
    %v171 = vextract.low.u32 %v170
    %v172 = vextract.high.u32 %v170
    %v173 = vshrl.u32 %v172, 4
    %v174 = vmul.u32 %v173, 24
    %v175 = vsub.s32 %v169, %v174
    %v176 = vsub.s32 0, %v175
    %v177 = vsel %vm167, %v176, %v175
    %vm178 = vcmp.lt.s32.totalorder %v122, 0
    %v179 = vsub.s32 0, %v122
    %v180 = vsel %vm178, %v179, %v122
    %v181 = vmul.u32.u64.compose %v180, 2863311531
    %v182 = vextract.low.u32 %v181
    %v183 = vextract.high.u32 %v181
    %v184 = vshrl.u32 %v183, 4
    %v185 = vmul.u32 %v184, 24
    %v186 = vsub.s32 %v180, %v185
    %v187 = vsub.s32 0, %v186
    %v188 = vsel %vm178, %v187, %v186
    %vm189 = vcmp.ne.s32.totalorder %v133, 0
    %vm190 = vcmp.ne.s32.totalorder %v144, 0
    %vm191 = vcmp.ne.s32.totalorder %v155, 0
    %vm192 = vcmp.ne.s32.totalorder %v166, 0
    %vm193 = vcmp.ne.s32.totalorder %v177, 0
    %vm194 = vcmp.ne.s32.totalorder %v188, 0
    %vm195 = vcmp.lt.s32.totalorder %v133, 0
    %vm196 = vcmp.lt.s32.totalorder %v144, 0
    %vm197 = vcmp.lt.s32.totalorder %v155, 0
    %vm198 = vcmp.lt.s32.totalorder %v166, 0
    %vm199 = vcmp.lt.s32.totalorder %v177, 0
    %vm200 = vcmp.lt.s32.totalorder %v188, 0
    %vm201 = vmand %vm195, %vm189
    %vm202 = vmand %vm196, %vm190
    %vm203 = vmand %vm197, %vm191
    %vm204 = vmand %vm198, %vm192
    %vm205 = vmand %vm199, %vm193
    %vm206 = vmand %vm200, %vm194
    %v207 = vadd.s32 %v133, 24
    %v208 = vadd.s32 %v144, 24
    %v209 = vadd.s32 %v155, 24
    %v210 = vadd.s32 %v166, 24
    %v211 = vadd.s32 %v177, 24
    %v212 = vadd.s32 %v188, 24
    %v213 = vsel %vm201, %v207, %v133
    %v214 = vsel %vm202, %v208, %v144
    %v215 = vsel %vm203, %v209, %v155
    %v216 = vsel %vm204, %v210, %v166
    %v217 = vsel %vm205, %v211, %v177
    %v218 = vsel %vm206, %v212, %v188
    %v219 = vld [vmem:[#allocation2] sm:$0xff]
    %v220 = vld [vmem:[#allocation2 + $0x8] sm:$0xff]
    %v221 = vld [vmem:[#allocation2 + $0x10] sm:$0xff]
    %v222 = vld [vmem:[#allocation2 + $0x18] sm:$0xff]
    %v223 = vld [vmem:[#allocation2 + $0x20] sm:$0xff]
    %v224 = vld [vmem:[#allocation2 + $0x28] sm:$0xff]
    %v225 = vld [vmem:[#allocation5] sm:$0xff]
    %v226 = vld [vmem:[#allocation5 + $0x8] sm:$0x3f]
    %v227 = vld [vmem:[#allocation7] sm:$0x1]
    %v229 = vlaneseq
    %v230 = vshrl.u32 %v229, 7
    %v231 = vsub.s32 0, %v230
    %v232 = vrot.slane %v227, %v231
    %vm234 = vcmask 113664
    %v236 = vsel %vm234, %v219, 0
    %v239 = vsel %vm234, %v220, 0
    %v242 = vsel %vm234, %v221, 0
    %v245 = vsel %vm234, %v222, 0
    %v248 = vsel %vm234, %v223, 0
    %v251 = vsel %vm234, %v224, 0
    %vm253 = vcmask 1045504
    %v255 = vsel %vm253, %v226, 0
    %257 = vmatprep.subr.mxu0 0.0
    %258 = vmatpush1.msra.mxu0 %v225
    %259 = vmatprep.subr.mxu0 0.0
    %260 = vmatpush1.msra.mxu0 %v255
    %261 = vmatprep.subr.mxu0 0.0
    %262 = vmatpush1.msra.mxu0 0.0
    %263 = vmatprep.subr.mxu0 0.0
    %264 = vmatpush1.msra.mxu0 0.0
    %265 = vmatprep.subr.mxu0 0.0
    %266 = vmatpush1.msra.mxu0 0.0
    %267 = vmatprep.subr.mxu0 0.0
    %268 = vmatpush1.msra.mxu0 0.0
    %269 = vmatprep.subr.mxu0 0.0
    %270 = vmatpush1.msra.mxu0 0.0
    %271 = vmatprep.subr.mxu0 0.0
    %272 = vmatpush1.msra.mxu0 0.0
    %273 = vmatprep.subr.mxu0 0.0
    %274 = vmatpush1.msra.mxu0 0.0
    %275 = vmatprep.subr.mxu0 0.0
    %276 = vmatpush1.msra.mxu0 0.0
    %277 = vmatprep.subr.mxu0 0.0
    %278 = vmatpush1.msra.mxu0 0.0
    %279 = vmatprep.subr.mxu0 0.0
    %280 = vmatpush1.msra.mxu0 0.0
    %281 = vmatprep.subr.mxu0 0.0
    %282 = vmatpush1.msra.mxu0 0.0
    %283 = vmatprep.subr.mxu0 0.0
    %284 = vmatpush1.msra.mxu0 0.0
    %285 = vmatprep.subr.mxu0 0.0
    %286 = vmatpush1.msra.mxu0 0.0
    %287 = vmatprep.subr.mxu0 0.0
    %288 = vmatpush1.msra.mxu0 0.0
    %289 = vmatprep.subr.mxu0 0.0
    %290 = vmatpush1.msra.mxu0 0.0
    %291 = vmatprep.subr.mxu0 0.0
    %292 = vmatpush1.msra.mxu0 0.0
    %293 = vmatprep.subr.mxu0 0.0
    %294 = vmatpush1.msra.mxu0 0.0
    %295 = vmatprep.subr.mxu0 0.0
    %296 = vmatpush1.msra.mxu0 0.0
    %297 = vmatprep.subr.mxu0 0.0
    %298 = vmatpush1.msra.mxu0 0.0
    %299 = vmatprep.subr.mxu0 0.0
    %300 = vmatpush1.msra.mxu0 0.0
    %301 = vmatprep.subr.mxu0 0.0
    %302 = vmatpush1.msra.mxu0 0.0
    %303 = vmatprep.subr.mxu0 0.0
    %304 = vmatpush1.msra.mxu0 0.0
    %305 = vmatprep.subr.mxu0 0.0
    %306 = vmatpush1.msra.mxu0 0.0
    %307 = vmatprep.subr.mxu0 0.0
    %308 = vmatpush1.msra.mxu0 0.0
    %309 = vmatprep.subr.mxu0 0.0
    %310 = vmatpush1.msra.mxu0 0.0
    %311 = vmatprep.subr.mxu0 0.0
    %312 = vmatpush1.msra.mxu0 0.0
    %313 = vmatprep.subr.mxu0 0.0
    %314 = vmatpush1.msra.mxu0 0.0
    %315 = vmatprep.subr.mxu0 0.0
    %316 = vmatpush1.msra.mxu0 0.0
    %317 = vmatprep.subr.mxu0 0.0
    %318 = vmatpush1.msra.mxu0 0.0
    %319 = vmatprep.subr.mxu0 0.0
    %320 = vmatpush1.msra.mxu0 0.0
    %321 = vmatprep.mubr.f32.mxu0 0.0
    %322 = vmatmul.mubr.f32.gmra.mrb[0].mxu0 %v236
    %v323 = vpop.f32.mrb[0].mxu0
    %v324 = vadd.f32 %v232, %v323
    %v325 = vpop.f32.mrb[0].mxu0
    %326 = vmatprep.mubr.f32.mxu0 0.0
    %327 = vmatmul.mubr.f32.gmra.mrb[0].mxu0 %v239
    %v328 = vpop.f32.mrb[0].mxu0
    %v329 = vadd.f32 %v232, %v328
    %v330 = vpop.f32.mrb[0].mxu0
    %331 = vmatprep.mubr.f32.mxu0 0.0
    %332 = vmatmul.mubr.f32.gmra.mrb[0].mxu0 %v242
    %v333 = vpop.f32.mrb[0].mxu0
    %v334 = vadd.f32 %v232, %v333
    %v335 = vpop.f32.mrb[0].mxu0
    %336 = vmatprep.mubr.f32.mxu0 0.0
    %337 = vmatmul.mubr.f32.gmra.mrb[0].mxu0 %v245
    %v338 = vpop.f32.mrb[0].mxu0
    %v339 = vadd.f32 %v232, %v338
    %v340 = vpop.f32.mrb[0].mxu0
    %341 = vmatprep.mubr.f32.mxu0 0.0
    %342 = vmatmul.mubr.f32.gmra.mrb[0].mxu0 %v248
    %v343 = vpop.f32.mrb[0].mxu0
    %v344 = vadd.f32 %v232, %v343
    %v345 = vpop.f32.mrb[0].mxu0
    %346 = vmatprep.mubr.f32.mxu0 0.0
    %347 = vmatmul.mubr.f32.gmra.mrb[0].mxu0 %v251
    %v348 = vpop.f32.mrb[0].mxu0
    %v349 = vadd.f32 %v232, %v348
    %v350 = vpop.f32.mrb[0].mxu0
    %351 = vdwg.mxu0
    %v352 = vmax.f32 %v324, 0.0
    %v353 = vmax.f32 %v329, 0.0
    %v354 = vmax.f32 %v334, 0.0
    %v355 = vmax.f32 %v339, 0.0
    %v356 = vmax.f32 %v344, 0.0
    %v357 = vmax.f32 %v349, 0.0
    %v358 = vrot.slane %v352, 7
    %v359 = vrot.slane %v353, 7
    %v360 = vrot.slane %v354, 7
    %v361 = vrot.slane %v355, 7
    %v362 = vrot.slane %v356, 7
    %v363 = vrot.slane %v357, 7
    %vm364 = vcmp.lt.s32.totalorder %v117, 1
    %v365 = vsel %vm364, %v362, %v363
    %v366 = vsel %vm364, %v361, %v362
    %v367 = vsel %vm364, %v360, %v361
    %v368 = vsel %vm364, %v359, %v360
    %v369 = vsel %vm364, %v358, %v359
    %v370 = vsel %vm364, %v363, %v358
    %vm371 = vcmp.ge.s32.totalorder %v213, 1
    %vm372 = vcmp.ge.s32.totalorder %v214, 1
    %vm373 = vcmp.ge.s32.totalorder %v215, 1
    %vm374 = vcmp.ge.s32.totalorder %v216, 1
    %vm375 = vcmp.ge.s32.totalorder %v217, 1
    %vm376 = vcmp.ge.s32.totalorder %v218, 1
    %vm377 = vcmp.lt.s32.totalorder %v213, 18
    %vm378 = vcmp.lt.s32.totalorder %v214, 18
    %vm379 = vcmp.lt.s32.totalorder %v215, 18
    %vm380 = vcmp.lt.s32.totalorder %v216, 18
    %vm381 = vcmp.lt.s32.totalorder %v217, 18
    %vm382 = vcmp.lt.s32.totalorder %v218, 18
    %vm383 = vmand %vm371, %vm377
    %vm384 = vmand %vm372, %vm378
    %vm385 = vmand %vm373, %vm379
    %vm386 = vmand %vm374, %vm380
    %vm387 = vmand %vm375, %vm381
    %vm388 = vmand %vm376, %vm382
    %v389 = vsel %vm383, 1, 0
    %v390 = vsel %vm384, 1, 0
    %v391 = vsel %vm385, 1, 0
    %v392 = vsel %vm386, 1, 0
    %v393 = vsel %vm387, 1, 0
    %v394 = vsel %vm388, 1, 0
    %vm395 = vcmp.eq.s32.totalorder %v389, 1
    %vm396 = vcmp.eq.s32.totalorder %v390, 1
    %vm397 = vcmp.eq.s32.totalorder %v391, 1
    %vm398 = vcmp.eq.s32.totalorder %v392, 1
    %vm399 = vcmp.eq.s32.totalorder %v393, 1
    %vm400 = vcmp.eq.s32.totalorder %v394, 1
    %v401 = vsel %vm395, %v370, 0.0
    %v402 = vsel %vm396, %v369, 0.0
    %v403 = vsel %vm397, %v368, 0.0
    %v404 = vsel %vm398, %v367, 0.0
    %v405 = vsel %vm399, %v366, 0.0
    %v406 = vsel %vm400, %v365, 0.0
    %v407 = vmax.f32 %v401, %v352
    %v408 = vmax.f32 %v402, %v353
    %v409 = vmax.f32 %v403, %v354
    %v410 = vmax.f32 %v404, %v355
    %v411 = vmax.f32 %v405, %v356
    %v412 = vmax.f32 %v406, %v357
    %v413 = vrot.slane %v352, 1
    %v414 = vrot.slane %v353, 1
    %v415 = vrot.slane %v354, 1
    %v416 = vrot.slane %v355, 1
    %v417 = vrot.slane %v356, 1
    %v418 = vrot.slane %v357, 1
    %vm419 = vcmp.lt.s32.totalorder %v117, 7
    %v420 = vsel %vm419, %v417, %v418
    %v421 = vsel %vm419, %v416, %v417
    %v422 = vsel %vm419, %v415, %v416
    %v423 = vsel %vm419, %v414, %v415
    %v424 = vsel %vm419, %v413, %v414
    %v425 = vsel %vm419, %v418, %v413
    %vm426 = vcmp.lt.s32.totalorder %v213, 16
    %vm427 = vcmp.lt.s32.totalorder %v214, 16
    %vm428 = vcmp.lt.s32.totalorder %v215, 16
    %vm429 = vcmp.lt.s32.totalorder %v216, 16
    %vm430 = vcmp.lt.s32.totalorder %v217, 16
    %vm431 = vcmp.lt.s32.totalorder %v218, 16
    %v432 = vsel %vm426, 1, 0
    %v433 = vsel %vm427, 1, 0
    %v434 = vsel %vm428, 1, 0
    %v435 = vsel %vm429, 1, 0
    %v436 = vsel %vm430, 1, 0
    %v437 = vsel %vm431, 1, 0
    %vm438 = vcmp.eq.s32.totalorder %v432, 1
    %vm439 = vcmp.eq.s32.totalorder %v433, 1
    %vm440 = vcmp.eq.s32.totalorder %v434, 1
    %vm441 = vcmp.eq.s32.totalorder %v435, 1
    %vm442 = vcmp.eq.s32.totalorder %v436, 1
    %vm443 = vcmp.eq.s32.totalorder %v437, 1
    %v444 = vsel %vm438, %v424, 0.0
    %v445 = vsel %vm439, %v423, 0.0
    %v446 = vsel %vm440, %v422, 0.0
    %v447 = vsel %vm441, %v421, 0.0
    %v448 = vsel %vm442, %v420, 0.0
    %v449 = vsel %vm443, %v425, 0.0
    %v450 = vmax.f32 %v407, %v444
    %v451 = vmax.f32 %v408, %v445
    %v452 = vmax.f32 %v409, %v446
    %v453 = vmax.f32 %v410, %v447
    %v454 = vmax.f32 %v411, %v448
    %v455 = vmax.f32 %v412, %v449
    %v456 = vrot.slane %v450, 7
    %v457 = vrot.slane %v451, 7
    %v458 = vrot.slane %v452, 7
    %v459 = vrot.slane %v453, 7
    %v460 = vrot.slane %v454, 7
    %v461 = vrot.slane %v455, 7
    %v462 = vsel %vm364, %v460, %v461
    %v463 = vsel %vm364, %v459, %v460
    %v464 = vsel %vm364, %v458, %v459
    %v465 = vsel %vm364, %v457, %v458
    %v466 = vsel %vm364, %v456, %v457
    %v467 = vsel %vm364, %v461, %v456
    %v468 = vsel %vm395, %v467, 0.0
    %v469 = vsel %vm396, %v466, 0.0
    %v470 = vsel %vm397, %v465, 0.0
    %v471 = vsel %vm398, %v464, 0.0
    %v472 = vsel %vm399, %v463, 0.0
    %v473 = vsel %vm400, %v462, 0.0
    %474 = vrot.lane.b32.xlu0 %v450, 32
    %v475 = vpop.permute.xlu0 %474
    %476 = vrot.lane.b32.xlu0 %v451, 32
    %v477 = vpop.permute.xlu0 %476
    %478 = vrot.lane.b32.xlu0 %v452, 32
    %v479 = vpop.permute.xlu0 %478
    %480 = vrot.lane.b32.xlu0 %v453, 32
    %v481 = vpop.permute.xlu0 %480
    %482 = vrot.lane.b32.xlu0 %v454, 32
    %v483 = vpop.permute.xlu0 %482
    %484 = vrot.lane.b32.xlu0 %v455, 32
    %v485 = vpop.permute.xlu0 %484
    %v486 = vadd.f32 %v468, %v475
    %v487 = vadd.f32 %v469, %v477
    %v488 = vadd.f32 %v470, %v479
    %v489 = vadd.f32 %v471, %v481
    %v490 = vadd.f32 %v472, %v483
    %v491 = vadd.f32 %v473, %v485
    %v492 = vrot.slane %v450, 1
    %v493 = vrot.slane %v451, 1
    %v494 = vrot.slane %v452, 1
    %v495 = vrot.slane %v453, 1
    %v496 = vrot.slane %v454, 1
    %v497 = vrot.slane %v455, 1
    %v498 = vsel %vm419, %v496, %v497
    %v499 = vsel %vm419, %v495, %v496
    %v500 = vsel %vm419, %v494, %v495
    %v501 = vsel %vm419, %v493, %v494
    %v502 = vsel %vm419, %v492, %v493
    %v503 = vsel %vm419, %v497, %v492
    %v504 = vsel %vm438, %v502, 0.0
    %v505 = vsel %vm439, %v501, 0.0
    %v506 = vsel %vm440, %v500, 0.0
    %v507 = vsel %vm441, %v499, 0.0
    %v508 = vsel %vm442, %v498, 0.0
    %v509 = vsel %vm443, %v503, 0.0
    %510 = vrot.lane.b32.xlu0 %v504, 64
    %v511 = vpop.permute.xlu0 %510
    %512 = vrot.lane.b32.xlu0 %v505, 64
    %v513 = vpop.permute.xlu0 %512
    %514 = vrot.lane.b32.xlu0 %v506, 64
    %v515 = vpop.permute.xlu0 %514
    %516 = vrot.lane.b32.xlu0 %v507, 64
    %v517 = vpop.permute.xlu0 %516
    %518 = vrot.lane.b32.xlu0 %v508, 64
    %v519 = vpop.permute.xlu0 %518
    %520 = vrot.lane.b32.xlu0 %v509, 64
    %v521 = vpop.permute.xlu0 %520
    %v522 = vadd.f32 %v486, %v511
    %v523 = vadd.f32 %v487, %v513
    %v524 = vadd.f32 %v488, %v515
    %v525 = vadd.f32 %v489, %v517
    %v526 = vadd.f32 %v490, %v519
    %v527 = vadd.f32 %v491, %v521
    %v528 = vld [vmem:[#allocation8] sm:$0xff]
    %v529 = vld [vmem:[#allocation8 + $0x8] sm:$0xff]
    %v530 = vld [vmem:[#allocation8 + $0x10] sm:$0xff]
    %v531 = vld [vmem:[#allocation8 + $0x18] sm:$0xff]
    %v532 = vld [vmem:[#allocation8 + $0x20] sm:$0xff]
    %v533 = vld [vmem:[#allocation8 + $0x28] sm:$0xff]
    %v534 = vld [vmem:[#allocation8 + $0x30] sm:$0xff]
    %v535 = vld [vmem:[#allocation8 + $0x38] sm:$0xff]
    %v536 = vld [vmem:[#allocation8 + $0x40] sm:$0xff]
    %v537 = vld [vmem:[#allocation8 + $0x48] sm:$0xff]
    %v538 = vld [vmem:[#allocation8 + $0x50] sm:$0xff]
    %v539 = vld [vmem:[#allocation8 + $0x58] sm:$0xff]
    %v540 = vld [vmem:[#allocation8 + $0x60] sm:$0xff]
    %v541 = vld [vmem:[#allocation8 + $0x68] sm:$0xff]
    %v542 = vld [vmem:[#allocation8 + $0x70] sm:$0xff]
    %v543 = vld [vmem:[#allocation8 + $0x78] sm:$0xff]
    %v544 = vld [vmem:[#allocation10] sm:$0x1]
    %v546 = vlaneseq
    %v547 = vshrl.u32 %v546, 7
    %v548 = vsub.s32 0, %v547
    %v549 = vrot.slane %v544, %v548
    %551 = vmatprep.subr.mxu0 0.0
    %552 = vmatpush1.msra.mxu0 %v528
    %553 = vmatprep.subr.mxu0 0.0
    %554 = vmatpush1.msra.mxu0 %v529
    %555 = vmatprep.subr.mxu0 0.0
    %556 = vmatpush1.msra.mxu0 %v530
    %557 = vmatprep.subr.mxu0 0.0
    %558 = vmatpush1.msra.mxu0 %v531
    %559 = vmatprep.subr.mxu0 0.0
    %560 = vmatpush1.msra.mxu0 %v532
    %561 = vmatprep.subr.mxu0 0.0
    %562 = vmatpush1.msra.mxu0 %v533
    %563 = vmatprep.subr.mxu0 0.0
    %564 = vmatpush1.msra.mxu0 %v534
    %565 = vmatprep.subr.mxu0 0.0
    %566 = vmatpush1.msra.mxu0 %v535
    %567 = vmatprep.subr.mxu0 0.0
    %568 = vmatpush1.msra.mxu0 %v536
    %569 = vmatprep.subr.mxu0 0.0
    %570 = vmatpush1.msra.mxu0 %v537
    %571 = vmatprep.subr.mxu0 0.0
    %572 = vmatpush1.msra.mxu0 %v538
    %573 = vmatprep.subr.mxu0 0.0
    %574 = vmatpush1.msra.mxu0 %v539
    %575 = vmatprep.subr.mxu0 0.0
    %576 = vmatpush1.msra.mxu0 %v540
    %577 = vmatprep.subr.mxu0 0.0
    %578 = vmatpush1.msra.mxu0 %v541
    %579 = vmatprep.subr.mxu0 0.0
    %580 = vmatpush1.msra.mxu0 %v542
    %581 = vmatprep.subr.mxu0 0.0
    %582 = vmatpush1.msra.mxu0 %v543
    %583 = vmatprep.subr.mxu0 0.0
    %584 = vmatpush1.msra.mxu0 0.0
    %585 = vmatprep.subr.mxu0 0.0
    %586 = vmatpush1.msra.mxu0 0.0
    %587 = vmatprep.subr.mxu0 0.0
    %588 = vmatpush1.msra.mxu0 0.0
    %589 = vmatprep.subr.mxu0 0.0
    %590 = vmatpush1.msra.mxu0 0.0
    %591 = vmatprep.subr.mxu0 0.0
    %592 = vmatpush1.msra.mxu0 0.0
    %593 = vmatprep.subr.mxu0 0.0
    %594 = vmatpush1.msra.mxu0 0.0
    %595 = vmatprep.subr.mxu0 0.0
    %596 = vmatpush1.msra.mxu0 0.0
    %597 = vmatprep.subr.mxu0 0.0
    %598 = vmatpush1.msra.mxu0 0.0
    %599 = vmatprep.subr.mxu0 0.0
    %600 = vmatpush1.msra.mxu0 0.0
    %601 = vmatprep.subr.mxu0 0.0
    %602 = vmatpush1.msra.mxu0 0.0
    %603 = vmatprep.subr.mxu0 0.0
    %604 = vmatpush1.msra.mxu0 0.0
    %605 = vmatprep.subr.mxu0 0.0
    %606 = vmatpush1.msra.mxu0 0.0
    %607 = vmatprep.subr.mxu0 0.0
    %608 = vmatpush1.msra.mxu0 0.0
    %609 = vmatprep.subr.mxu0 0.0
    %610 = vmatpush1.msra.mxu0 0.0
    %611 = vmatprep.subr.mxu0 0.0
    %612 = vmatpush1.msra.mxu0 0.0
    %613 = vmatprep.subr.mxu0 0.0
    %614 = vmatpush1.msra.mxu0 0.0
    %615 = vmatprep.mubr.f32.mxu0 0.0
    %616 = vmatmul.mubr.f32.gmra.mrb[0].mxu0 %v522
    %v617 = vpop.f32.mrb[0].mxu0
    %v618 = vadd.f32 %v549, %v617
    %v619 = vpop.f32.mrb[0].mxu0
    %620 = vmatprep.mubr.f32.mxu0 0.0
    %621 = vmatmul.mubr.f32.gmra.mrb[0].mxu0 %v523
    %v622 = vpop.f32.mrb[0].mxu0
    %v623 = vadd.f32 %v549, %v622
    %v624 = vpop.f32.mrb[0].mxu0
    %625 = vmatprep.mubr.f32.mxu0 0.0
    %626 = vmatmul.mubr.f32.gmra.mrb[0].mxu0 %v524
    %v627 = vpop.f32.mrb[0].mxu0
    %v628 = vadd.f32 %v549, %v627
    %v629 = vpop.f32.mrb[0].mxu0
    %630 = vmatprep.mubr.f32.mxu0 0.0
    %631 = vmatmul.mubr.f32.gmra.mrb[0].mxu0 %v525
    %v632 = vpop.f32.mrb[0].mxu0
    %v633 = vadd.f32 %v549, %v632
    %v634 = vpop.f32.mrb[0].mxu0
    %635 = vmatprep.mubr.f32.mxu0 0.0
    %636 = vmatmul.mubr.f32.gmra.mrb[0].mxu0 %v526
    %v637 = vpop.f32.mrb[0].mxu0
    %v638 = vadd.f32 %v549, %v637
    %v639 = vpop.f32.mrb[0].mxu0
    %640 = vmatprep.mubr.f32.mxu0 0.0
    %641 = vmatmul.mubr.f32.gmra.mrb[0].mxu0 %v527
    %v642 = vpop.f32.mrb[0].mxu0
    %v643 = vadd.f32 %v549, %v642
    %v644 = vpop.f32.mrb[0].mxu0
    %645 = vdwg.mxu0
    %v646 = vmax.f32 %v618, 0.0
    %v647 = vmax.f32 %v623, 0.0
    %v648 = vmax.f32 %v628, 0.0
    %v649 = vmax.f32 %v633, 0.0
    %v650 = vmax.f32 %v638, 0.0
    %v651 = vmax.f32 %v643, 0.0
    %v652 = vrot.slane %v646, 7
    %v653 = vrot.slane %v647, 7
    %v654 = vrot.slane %v648, 7
    %v655 = vrot.slane %v649, 7
    %v656 = vrot.slane %v650, 7
    %v657 = vrot.slane %v651, 7
    %v658 = vsel %vm364, %v656, %v657
    %v659 = vsel %vm364, %v655, %v656
    %v660 = vsel %vm364, %v654, %v655
    %v661 = vsel %vm364, %v653, %v654
    %v662 = vsel %vm364, %v652, %v653
    %v663 = vsel %vm364, %v657, %v652
    %v664 = vsel %vm395, %v663, 0.0
    %v665 = vsel %vm396, %v662, 0.0
    %v666 = vsel %vm397, %v661, 0.0
    %v667 = vsel %vm398, %v660, 0.0
    %v668 = vsel %vm399, %v659, 0.0
    %v669 = vsel %vm400, %v658, 0.0
    %vm670 = vcmp.lt.s32.totalorder %v213, 17
    %vm671 = vcmp.lt.s32.totalorder %v214, 17
    %vm672 = vcmp.lt.s32.totalorder %v215, 17
    %vm673 = vcmp.lt.s32.totalorder %v216, 17
    %vm674 = vcmp.lt.s32.totalorder %v217, 17
    %vm675 = vcmp.lt.s32.totalorder %v218, 17
    %v676 = vsel %vm670, 1, 0
    %v677 = vsel %vm671, 1, 0
    %v678 = vsel %vm672, 1, 0
    %v679 = vsel %vm673, 1, 0
    %v680 = vsel %vm674, 1, 0
    %v681 = vsel %vm675, 1, 0
    %vm682 = vcmp.eq.s32.totalorder %v676, 1
    %vm683 = vcmp.eq.s32.totalorder %v677, 1
    %vm684 = vcmp.eq.s32.totalorder %v678, 1
    %vm685 = vcmp.eq.s32.totalorder %v679, 1
    %vm686 = vcmp.eq.s32.totalorder %v680, 1
    %vm687 = vcmp.eq.s32.totalorder %v681, 1
    %v688 = vsel %vm682, %v646, 0.0
    %v689 = vsel %vm683, %v647, 0.0
    %v690 = vsel %vm684, %v648, 0.0
    %v691 = vsel %vm685, %v649, 0.0
    %v692 = vsel %vm686, %v650, 0.0
    %v693 = vsel %vm687, %v651, 0.0
    %v694 = vmax.f32 %v664, %v688
    %v695 = vmax.f32 %v665, %v689
    %v696 = vmax.f32 %v666, %v690
    %v697 = vmax.f32 %v667, %v691
    %v698 = vmax.f32 %v668, %v692
    %v699 = vmax.f32 %v669, %v693
    %v700 = vrot.slane %v694, 2
    %v701 = vrot.slane %v695, 2
    %v702 = vrot.slane %v696, 2
    %v703 = vrot.slane %v697, 2
    %v704 = vrot.slane %v698, 2
    %v705 = vrot.slane %v699, 2
    %vm706 = vcmp.lt.s32.totalorder %v117, 6
    %v707 = vsel %vm706, %v704, %v705
    %v708 = vsel %vm706, %v703, %v704
    %v709 = vsel %vm706, %v702, %v703
    %v710 = vsel %vm706, %v701, %v702
    %v711 = vsel %vm706, %v700, %v701
    %v712 = vsel %vm706, %v705, %v700
    %v713 = vsel %vm438, %v711, 0.0
    %v714 = vsel %vm439, %v710, 0.0
    %v715 = vsel %vm440, %v709, 0.0
    %v716 = vsel %vm441, %v708, 0.0
    %v717 = vsel %vm442, %v707, 0.0
    %v718 = vsel %vm443, %v712, 0.0
    %v719 = vmax.f32 %v694, %v713
    %v720 = vmax.f32 %v695, %v714
    %v721 = vmax.f32 %v696, %v715
    %v722 = vmax.f32 %v697, %v716
    %v723 = vmax.f32 %v698, %v717
    %v724 = vmax.f32 %v699, %v718
    %v725 = vrot.slane %v719, 7
    %v726 = vrot.slane %v720, 7
    %v727 = vrot.slane %v721, 7
    %v728 = vrot.slane %v722, 7
    %v729 = vrot.slane %v723, 7
    %v730 = vrot.slane %v724, 7
    %v731 = vsel %vm364, %v729, %v730
    %v732 = vsel %vm364, %v728, %v729
    %v733 = vsel %vm364, %v727, %v728
    %v734 = vsel %vm364, %v726, %v727
    %v735 = vsel %vm364, %v725, %v726
    %v736 = vsel %vm364, %v730, %v725
    %vm737 = vmand %vm371, %vm670
    %vm738 = vmand %vm372, %vm671
    %vm739 = vmand %vm373, %vm672
    %vm740 = vmand %vm374, %vm673
    %vm741 = vmand %vm375, %vm674
    %vm742 = vmand %vm376, %vm675
    %v743 = vsel %vm737, 1, 0
    %v744 = vsel %vm738, 1, 0
    %v745 = vsel %vm739, 1, 0
    %v746 = vsel %vm740, 1, 0
    %v747 = vsel %vm741, 1, 0
    %v748 = vsel %vm742, 1, 0
    %vm749 = vcmp.eq.s32.totalorder %v743, 1
    %vm750 = vcmp.eq.s32.totalorder %v744, 1
    %vm751 = vcmp.eq.s32.totalorder %v745, 1
    %vm752 = vcmp.eq.s32.totalorder %v746, 1
    %vm753 = vcmp.eq.s32.totalorder %v747, 1
    %vm754 = vcmp.eq.s32.totalorder %v748, 1
    %v755 = vsel %vm749, %v736, 0.0
    %v756 = vsel %vm750, %v735, 0.0
    %v757 = vsel %vm751, %v734, 0.0
    %v758 = vsel %vm752, %v733, 0.0
    %v759 = vsel %vm753, %v732, 0.0
    %v760 = vsel %vm754, %v731, 0.0
    %761 = vrot.lane.b32.xlu0 %v719, 32
    %v762 = vpop.permute.xlu0 %761
    %763 = vrot.lane.b32.xlu0 %v720, 32
    %v764 = vpop.permute.xlu0 %763
    %765 = vrot.lane.b32.xlu0 %v721, 32
    %v766 = vpop.permute.xlu0 %765
    %767 = vrot.lane.b32.xlu0 %v722, 32
    %v768 = vpop.permute.xlu0 %767
    %769 = vrot.lane.b32.xlu0 %v723, 32
    %v770 = vpop.permute.xlu0 %769
    %771 = vrot.lane.b32.xlu0 %v724, 32
    %v772 = vpop.permute.xlu0 %771
    %v773 = vadd.f32 %v755, %v762
    %v774 = vadd.f32 %v756, %v764
    %v775 = vadd.f32 %v757, %v766
    %v776 = vadd.f32 %v758, %v768
    %v777 = vadd.f32 %v759, %v770
    %v778 = vadd.f32 %v760, %v772
    %v779 = vrot.slane %v719, 1
    %v780 = vrot.slane %v720, 1
    %v781 = vrot.slane %v721, 1
    %v782 = vrot.slane %v722, 1
    %v783 = vrot.slane %v723, 1
    %v784 = vrot.slane %v724, 1
    %v785 = vsel %vm419, %v783, %v784
    %v786 = vsel %vm419, %v782, %v783
    %v787 = vsel %vm419, %v781, %v782
    %v788 = vsel %vm419, %v780, %v781
    %v789 = vsel %vm419, %v779, %v780
    %v790 = vsel %vm419, %v784, %v779
    %vm791 = vcmp.lt.s32.totalorder %v213, 15
    %vm792 = vcmp.lt.s32.totalorder %v214, 15
    %vm793 = vcmp.lt.s32.totalorder %v215, 15
    %vm794 = vcmp.lt.s32.totalorder %v216, 15
    %vm795 = vcmp.lt.s32.totalorder %v217, 15
    %vm796 = vcmp.lt.s32.totalorder %v218, 15
    %v797 = vsel %vm791, 1, 0
    %v798 = vsel %vm792, 1, 0
    %v799 = vsel %vm793, 1, 0
    %v800 = vsel %vm794, 1, 0
    %v801 = vsel %vm795, 1, 0
    %v802 = vsel %vm796, 1, 0
    %vm803 = vcmp.eq.s32.totalorder %v797, 1
    %vm804 = vcmp.eq.s32.totalorder %v798, 1
    %vm805 = vcmp.eq.s32.totalorder %v799, 1
    %vm806 = vcmp.eq.s32.totalorder %v800, 1
    %vm807 = vcmp.eq.s32.totalorder %v801, 1
    %vm808 = vcmp.eq.s32.totalorder %v802, 1
    %v809 = vsel %vm803, %v789, 0.0
    %v810 = vsel %vm804, %v788, 0.0
    %v811 = vsel %vm805, %v787, 0.0
    %v812 = vsel %vm806, %v786, 0.0
    %v813 = vsel %vm807, %v785, 0.0
    %v814 = vsel %vm808, %v790, 0.0
    %815 = vrot.lane.b32.xlu0 %v809, 64
    %v816 = vpop.permute.xlu0 %815
    %817 = vrot.lane.b32.xlu0 %v810, 64
    %v818 = vpop.permute.xlu0 %817
    %819 = vrot.lane.b32.xlu0 %v811, 64
    %v820 = vpop.permute.xlu0 %819
    %821 = vrot.lane.b32.xlu0 %v812, 64
    %v822 = vpop.permute.xlu0 %821
    %823 = vrot.lane.b32.xlu0 %v813, 64
    %v824 = vpop.permute.xlu0 %823
    %825 = vrot.lane.b32.xlu0 %v814, 64
    %v826 = vpop.permute.xlu0 %825
    %v827 = vadd.f32 %v773, %v816
    %v828 = vadd.f32 %v774, %v818
    %v829 = vadd.f32 %v775, %v820
    %v830 = vadd.f32 %v776, %v822
    %v831 = vadd.f32 %v777, %v824
    %v832 = vadd.f32 %v778, %v826
    %v833 = vld [vmem:[#allocation11] sm:$0xff]
    %v834 = vld [vmem:[#allocation11 + $0x8] sm:$0xff]
    %v835 = vld [vmem:[#allocation11 + $0x10] sm:$0xff]
    %v836 = vld [vmem:[#allocation11 + $0x18] sm:$0xff]
    %v837 = vld [vmem:[#allocation11 + $0x20] sm:$0xff]
    %v838 = vld [vmem:[#allocation11 + $0x28] sm:$0xff]
    %v839 = vld [vmem:[#allocation11 + $0x30] sm:$0xff]
    %v840 = vld [vmem:[#allocation11 + $0x38] sm:$0xff]
    %v841 = vld [vmem:[#allocation11 + $0x40] sm:$0xff]
    %v842 = vld [vmem:[#allocation11 + $0x48] sm:$0xff]
    %v843 = vld [vmem:[#allocation11 + $0x50] sm:$0xff]
    %v844 = vld [vmem:[#allocation11 + $0x58] sm:$0xff]
    %v845 = vld [vmem:[#allocation11 + $0x60] sm:$0xff]
    %v846 = vld [vmem:[#allocation11 + $0x68] sm:$0xff]
    %v847 = vld [vmem:[#allocation11 + $0x70] sm:$0xff]
    %v848 = vld [vmem:[#allocation11 + $0x78] sm:$0xff]
    %v849 = vld [vmem:[#allocation13] sm:$0x1]
    %v851 = vlaneseq
    %v852 = vshrl.u32 %v851, 7
    %v853 = vsub.s32 0, %v852
    %v854 = vrot.slane %v849, %v853
    %856 = vmatprep.subr.mxu0 0.0
    %857 = vmatpush1.msra.mxu0 %v833
    %858 = vmatprep.subr.mxu0 0.0
    %859 = vmatpush1.msra.mxu0 %v834
    %860 = vmatprep.subr.mxu0 0.0
    %861 = vmatpush1.msra.mxu0 %v835
    %862 = vmatprep.subr.mxu0 0.0
    %863 = vmatpush1.msra.mxu0 %v836
    %864 = vmatprep.subr.mxu0 0.0
    %865 = vmatpush1.msra.mxu0 %v837
    %866 = vmatprep.subr.mxu0 0.0
    %867 = vmatpush1.msra.mxu0 %v838
    %868 = vmatprep.subr.mxu0 0.0
    %869 = vmatpush1.msra.mxu0 %v839
    %870 = vmatprep.subr.mxu0 0.0
    %871 = vmatpush1.msra.mxu0 %v840
    %872 = vmatprep.subr.mxu0 0.0
    %873 = vmatpush1.msra.mxu0 %v841
    %874 = vmatprep.subr.mxu0 0.0
    %875 = vmatpush1.msra.mxu0 %v842
    %876 = vmatprep.subr.mxu0 0.0
    %877 = vmatpush1.msra.mxu0 %v843
    %878 = vmatprep.subr.mxu0 0.0
    %879 = vmatpush1.msra.mxu0 %v844
    %880 = vmatprep.subr.mxu0 0.0
    %881 = vmatpush1.msra.mxu0 %v845
    %882 = vmatprep.subr.mxu0 0.0
    %883 = vmatpush1.msra.mxu0 %v846
    %884 = vmatprep.subr.mxu0 0.0
    %885 = vmatpush1.msra.mxu0 %v847
    %886 = vmatprep.subr.mxu0 0.0
    %887 = vmatpush1.msra.mxu0 %v848
    %888 = vmatprep.subr.mxu0 0.0
    %889 = vmatpush1.msra.mxu0 0.0
    %890 = vmatprep.subr.mxu0 0.0
    %891 = vmatpush1.msra.mxu0 0.0
    %892 = vmatprep.subr.mxu0 0.0
    %893 = vmatpush1.msra.mxu0 0.0
    %894 = vmatprep.subr.mxu0 0.0
    %895 = vmatpush1.msra.mxu0 0.0
    %896 = vmatprep.subr.mxu0 0.0
    %897 = vmatpush1.msra.mxu0 0.0
    %898 = vmatprep.subr.mxu0 0.0
    %899 = vmatpush1.msra.mxu0 0.0
    %900 = vmatprep.subr.mxu0 0.0
    %901 = vmatpush1.msra.mxu0 0.0
    %902 = vmatprep.subr.mxu0 0.0
    %903 = vmatpush1.msra.mxu0 0.0
    %904 = vmatprep.subr.mxu0 0.0
    %905 = vmatpush1.msra.mxu0 0.0
    %906 = vmatprep.subr.mxu0 0.0
    %907 = vmatpush1.msra.mxu0 0.0
    %908 = vmatprep.subr.mxu0 0.0
    %909 = vmatpush1.msra.mxu0 0.0
    %910 = vmatprep.subr.mxu0 0.0
    %911 = vmatpush1.msra.mxu0 0.0
    %912 = vmatprep.subr.mxu0 0.0
    %913 = vmatpush1.msra.mxu0 0.0
    %914 = vmatprep.subr.mxu0 0.0
    %915 = vmatpush1.msra.mxu0 0.0
    %916 = vmatprep.subr.mxu0 0.0
    %917 = vmatpush1.msra.mxu0 0.0
    %918 = vmatprep.subr.mxu0 0.0
    %919 = vmatpush1.msra.mxu0 0.0
    %920 = vmatprep.mubr.f32.mxu0 0.0
    %921 = vmatmul.mubr.f32.gmra.mrb[0].mxu0 %v827
    %v922 = vpop.f32.mrb[0].mxu0
    %v923 = vadd.f32 %v854, %v922
    %v924 = vpop.f32.mrb[0].mxu0
    %925 = vmatprep.mubr.f32.mxu0 0.0
    %926 = vmatmul.mubr.f32.gmra.mrb[0].mxu0 %v828
    %v927 = vpop.f32.mrb[0].mxu0
    %v928 = vadd.f32 %v854, %v927
    %v929 = vpop.f32.mrb[0].mxu0
    %930 = vmatprep.mubr.f32.mxu0 0.0
    %931 = vmatmul.mubr.f32.gmra.mrb[0].mxu0 %v829
    %v932 = vpop.f32.mrb[0].mxu0
    %v933 = vadd.f32 %v854, %v932
    %v934 = vpop.f32.mrb[0].mxu0
    %935 = vmatprep.mubr.f32.mxu0 0.0
    %936 = vmatmul.mubr.f32.gmra.mrb[0].mxu0 %v830
    %v937 = vpop.f32.mrb[0].mxu0
    %v938 = vadd.f32 %v854, %v937
    %v939 = vpop.f32.mrb[0].mxu0
    %940 = vmatprep.mubr.f32.mxu0 0.0
    %941 = vmatmul.mubr.f32.gmra.mrb[0].mxu0 %v831
    %v942 = vpop.f32.mrb[0].mxu0
    %v943 = vadd.f32 %v854, %v942
    %v944 = vpop.f32.mrb[0].mxu0
    %945 = vmatprep.mubr.f32.mxu0 0.0
    %946 = vmatmul.mubr.f32.gmra.mrb[0].mxu0 %v832
    %v947 = vpop.f32.mrb[0].mxu0
    %v948 = vadd.f32 %v854, %v947
    %v949 = vpop.f32.mrb[0].mxu0
    %950 = vdwg.mxu0
    %v951 = vmax.f32 %v923, 0.0
    %v952 = vmax.f32 %v928, 0.0
    %v953 = vmax.f32 %v933, 0.0
    %v954 = vmax.f32 %v938, 0.0
    %v955 = vmax.f32 %v943, 0.0
    %v956 = vmax.f32 %v948, 0.0
    %v957 = vrot.slane %v951, 7
    %v958 = vrot.slane %v952, 7
    %v959 = vrot.slane %v953, 7
    %v960 = vrot.slane %v954, 7
    %v961 = vrot.slane %v955, 7
    %v962 = vrot.slane %v956, 7
    %v963 = vsel %vm364, %v961, %v962
    %v964 = vsel %vm364, %v960, %v961
    %v965 = vsel %vm364, %v959, %v960
    %v966 = vsel %vm364, %v958, %v959
    %v967 = vsel %vm364, %v957, %v958
    %v968 = vsel %vm364, %v962, %v957
    %v969 = vsel %vm749, %v968, 0.0
    %v970 = vsel %vm750, %v967, 0.0
    %v971 = vsel %vm751, %v966, 0.0
    %v972 = vsel %vm752, %v965, 0.0
    %v973 = vsel %vm753, %v964, 0.0
    %v974 = vsel %vm754, %v963, 0.0
    %v975 = vmax.f32 %v969, %v951
    %v976 = vmax.f32 %v970, %v952
    %v977 = vmax.f32 %v971, %v953
    %v978 = vmax.f32 %v972, %v954
    %v979 = vmax.f32 %v973, %v955
    %v980 = vmax.f32 %v974, %v956
    %v981 = vrot.slane %v951, 1
    %v982 = vrot.slane %v952, 1
    %v983 = vrot.slane %v953, 1
    %v984 = vrot.slane %v954, 1
    %v985 = vrot.slane %v955, 1
    %v986 = vrot.slane %v956, 1
    %v987 = vsel %vm419, %v985, %v986
    %v988 = vsel %vm419, %v984, %v985
    %v989 = vsel %vm419, %v983, %v984
    %v990 = vsel %vm419, %v982, %v983
    %v991 = vsel %vm419, %v981, %v982
    %v992 = vsel %vm419, %v986, %v981
    %v993 = vsel %vm803, %v991, 0.0
    %v994 = vsel %vm804, %v990, 0.0
    %v995 = vsel %vm805, %v989, 0.0
    %v996 = vsel %vm806, %v988, 0.0
    %v997 = vsel %vm807, %v987, 0.0
    %v998 = vsel %vm808, %v992, 0.0
    %v999 = vmax.f32 %v975, %v993
    %v1000 = vmax.f32 %v976, %v994
    %v1001 = vmax.f32 %v977, %v995
    %v1002 = vmax.f32 %v978, %v996
    %v1003 = vmax.f32 %v979, %v997
    %v1004 = vmax.f32 %v980, %v998
    %1005 = vst [vmem:[#allocation14] sm:$0xff] %v999
    %1006 = vst [vmem:[#allocation14 + $0x8] sm:$0xff] %v1000
    %1007 = vst [vmem:[#allocation14 + $0x10] sm:$0xff] %v1001
    %1008 = vst [vmem:[#allocation14 + $0x18] sm:$0xff] %v1002
    %1009 = vst [vmem:[#allocation14 + $0x20] sm:$0xff] %v1003
    %1010 = vst [vmem:[#allocation14 + $0x28] sm:$0xff] %v1004
    // Predicated region
    $region58: #{tpu_custom_call.1} parent=1 // pred_check
      _
    $region59: #{tpu_custom_call.1} parent=1 // pred_check_branch
      %1012 = sbr.rel (0) target = $region61
    $region60: #{tpu_custom_call.1} parent=1 // pred_region
      %s1014 = ssub.s32 768, 768
      %1015 = vsyncadd [#allocation4], %s1014
      %s1016 = sshll.u32 [#allocation14], 4
      %s1017 = int_to_ptr.vmem [resolvable:$true] %s1016
      %1022 = dma.vmem_to_hbm [thread:$0]  %s1017, 768, %s7, [#allocation4], 128, 128, 8
    $region61: #{tpu_custom_call.1} parent=1 // pred_fallthru
      _
    // Predicated region
    $region62: #{tpu_custom_call.1} parent=1 // pred_check
      _
    $region63: #{tpu_custom_call.1} parent=1 // pred_check_branch
      %1024 = sbr.rel (0) target = $region65
    $region64: #{tpu_custom_call.1} parent=1 // pred_region
      %1025 = dma.done [#allocation4], 768
    $region65: #{tpu_custom_call.1} parent=1 // pred_fallthru
      _
    %1026 = vsyncpa [#allocation3], 1
    %1027 = vsyncpa [#allocation6], 1
    %1028 = vsyncpa [#allocation9], 1
    %1029 = vsyncpa [#allocation12], 1
    %1030 = vsyncpa [#allocation4], 1

</llo_original>
